<compile_context>
chip_gen: v6e
topology: v6e:2x2x1
jax: 0.10.0
libtpu: 0.0.40
codegen_flags: <defaults>
</compile_context>

<pallas_src>
import functools

import jax
import jax.numpy as jnp
from jax import lax
from jax.experimental import pallas as pl
from jax.experimental.pallas import tpu as pltpu


def _round_up(v, m):
    return (v + m - 1) // m * m


def _vmem_limit_bytes():
    # Generation-dependent VMEM budget: ~3/4 of per-core VMEM, capped at 100 MiB
    # (v5e/v6e: 128 MiB -> 96 MiB, v7x: 64 MiB -> 48 MiB). Conservative fallback.
    try:
        cap = getattr(pltpu.get_tpu_info(), "vmem_capacity_bytes", None)
        if cap:
            return int(min(cap * 3 // 4, 100 * 1024 * 1024))
    except Exception:
        pass
    return 48 * 1024 * 1024


# ---------------------------------------------------------------------------
# Kernel 1: fused node projections  proj = x @ [A|D|E|B] + bias
#           -> ax table (cols 0:H) and deb table (cols H:4H == [D|E|B])
# ---------------------------------------------------------------------------
def node_proj_kernel(x_ref, wn_ref, bn_ref, ax_ref, deb_ref, *, out_dim,
                     compute_dtype):
    x = x_ref[...].astype(compute_dtype)
    proj = (jnp.dot(x, wn_ref[...], preferred_element_type=jnp.float32)
            + bn_ref[...])
    ax_ref[...] = proj[:, :out_dim]
    deb_ref[...] = proj[:, out_dim:]


# ---------------------------------------------------------------------------
# Kernel 2: edge messages + gated aggregation (index-driven gather / scatter)
# ---------------------------------------------------------------------------
def edge_kernel(row_sref, col_sref,                    # scalar prefetch (SMEM)
                e_ref, wc_ref, bc_ref, deb_ref,        # inputs
                e_out_ref, aggr_ref,                    # outputs
                dx_ref, eb_ref, gated_ref,              # VMEM scratch
                *, te, out_dim, n_real_edges, grid_e_per, compute_dtype):
    H = out_dim
    tile = pl.program_id(0) * grid_e_per + pl.program_id(1)
    base = tile * te

    # Init the per-split node accumulator once; it stays VMEM-resident across
    # this split's edge tiles (output block index is constant along axis t).
    @pl.when(pl.program_id(1) == 0)
    def _():
        aggr_ref[...] = jnp.zeros_like(aggr_ref)

    # --- gather: Dx[row] and the adjacent [Ex|Bx][col] columns (2 loads/edge) ----
    # Unrolled so the LLO scheduler can co-issue the independent loads/stores.
    def gather_body(i, carry):
        r = row_sref[base + i]
        c = col_sref[base + i]
        dx_ref[pl.ds(i, 1), :] = deb_ref[pl.ds(r, 1), pl.ds(0, H)]
        eb_ref[pl.ds(i, 1), :] = deb_ref[pl.ds(c, 1), pl.ds(H, 2 * H)]
        return carry

    # TODO(synk): static bounds required for unroll; padded edges in the last tile
    #             gather row 0 and are masked below (no dynamic trip count).
    lax.fori_loop(0, te, gather_body, 0, unroll=8)

    # --- vectorized edge math -----------------------------------------------------
    ce = (jnp.dot(e_ref[...].astype(compute_dtype), wc_ref[...],
                  preferred_element_type=jnp.float32) + bc_ref[...])
    eb = eb_ref[...]
    e_ij = dx_ref[...] + eb[:, :H] + ce
    valid = (base + lax.broadcasted_iota(jnp.int32, (te, 1), 0)) < n_real_edges
    gated_ref[...] = jnp.where(valid, jax.nn.sigmoid(e_ij) * eb[:, H:], 0.0)

    # e_final = e + relu(e_ij)   (identity residual: in_dim_edge == out_dim)
    e_out_ref[...] = e_ref[...].astype(jnp.float32) + jnp.maximum(e_ij, 0.0)

    # --- scatter-add (aggr='add') into the resident per-split accumulator ---------
    # The RMW chain on aggr_ref stays in program order (duplicate rows are safe);
    # unrolling overlaps the independent gated_ref loads with the chain.
    def scatter_body(i, carry):
        r = row_sref[base + i]
        aggr_ref[pl.ds(r, 1), :] = (aggr_ref[pl.ds(r, 1), :] +
                                    gated_ref[pl.ds(i, 1), :])
        return carry

    lax.fori_loop(0, te, scatter_body, 0, unroll=8)


# ---------------------------------------------------------------------------
# Kernel 3: sum split partials + node update (residual + ReLU) + FFN block
# ---------------------------------------------------------------------------
def node_update_kernel(x_ref, ax_ref, aggr_ref, w1_ref, b1_ref, w2_ref, b2_ref,
                       x_out_ref, *, compute_dtype):
    aggr = jnp.sum(aggr_ref[...], axis=0)          # add per-split partials
    x_final = (x_ref[...].astype(jnp.float32) +
               jnp.maximum(ax_ref[...] + aggr, 0.0))
    h = jnp.maximum(
        jnp.dot(x_final.astype(compute_dtype), w1_ref[...],
                preferred_element_type=jnp.float32) + b1_ref[...], 0.0)
    ff = jnp.dot(h.astype(compute_dtype), w2_ref[...],
                 preferred_element_type=jnp.float32) + b2_ref[...]
    x_out_ref[...] = x_final + ff


# ---------------------------------------------------------------------------
# Wrapper
# ---------------------------------------------------------------------------
def gated_gcn_layer(x, e, row, col, params, *, tm=256, te=256, edge_splits=2,
                    compute_dtype=jnp.float32):
    """StandaloneGatedGCNLayer forward (residual, FFN, ReLU, aggr='add', no BN,
    dropout=0) as three tiled Pallas TPU kernels."""
    N, D = x.shape
    E, De = e.shape
    H = params["wn"].shape[1] // 4
    assert D % 128 == 0 and H % 128 == 0 and De % 128 == 0, "dims must be x128"
    assert D == H and De == H, "identity-residual config requires in_dim == out_dim"

    f32 = jnp.float32
    x = x.astype(f32)
    e = e.astype(f32)

    # Reorder fused node-projection columns [A|B|D|E] -> [A|D|E|B] so the two
    # col-indexed slices (Ex, Bx) are adjacent -> single (1,2H) gather per edge.
    wa, wb, wd, we_ = jnp.split(params["wn"].astype(f32), 4, axis=1)
    ba, bb, bd, be_ = jnp.split(params["bn"].astype(f32), 4, axis=1)
    wn_r = jnp.concatenate([wa, wd, we_, wb], axis=1).astype(compute_dtype)
    bn_r = jnp.concatenate([ba, bd, be_, bb], axis=1)
    wc = params["wc"].astype(compute_dtype)
    bc = params["bc"].astype(f32)
    w1 = params["w1"].astype(compute_dtype)
    b1 = params["b1"].astype(f32)
    w2 = params["w2"].astype(compute_dtype)
    b2 = params["b2"].astype(f32)

    vmem_limit = _vmem_limit_bytes()
    node_cparams = pltpu.CompilerParams(
        dimension_semantics=("parallel",), vmem_limit_bytes=vmem_limit)

    n_pad = _round_up(max(N, tm), tm)
    x_p = jnp.pad(x, ((0, n_pad - N), (0, 0)))
    grid_n = n_pad // tm
    n_split = max(int(edge_splits), 1)

    # ---- K1: node projections (two tables: Ax and [D|E|B]) ----------------------
    ax, deb = pl.pallas_call(
        functools.partial(node_proj_kernel, out_dim=H, compute_dtype=compute_dtype),
        out_shape=(jax.ShapeDtypeStruct((n_pad, H), f32),
                   jax.ShapeDtypeStruct((n_pad, 3 * H), f32)),
        grid=(grid_n,),
        in_specs=[pl.BlockSpec((tm, D), lambda i: (i, 0)),
                  pl.BlockSpec((D, 4 * H), lambda i: (0, 0)),
                  pl.BlockSpec((1, 4 * H), lambda i: (0, 0))],
        out_specs=(pl.BlockSpec((tm, H), lambda i: (i, 0)),
                   pl.BlockSpec((tm, 3 * H), lambda i: (i, 0))),
        compiler_params=node_cparams,
        cost_estimate=pl.CostEstimate(
            flops=2 * n_pad * D * 4 * H, transcendentals=0,
            bytes_accessed=4 * (n_pad * D + D * 4 * H + n_pad * 4 * H)),
    )(x_p, wn_r, bn_r)

    # ---- K2: edge messages + aggregation ----------------------------------------
    if E > 0:
        e_pad_n = _round_up(max(E, 1), te * n_split)
        e_p = jnp.pad(e, ((0, e_pad_n - E), (0, 0)))
        row_p = jnp.pad(row.astype(jnp.int32), (0, e_pad_n - E))
        col_p = jnp.pad(col.astype(jnp.int32), (0, e_pad_n - E))
        grid_e_per = e_pad_n // (te * n_split)

        # TODO(synk): row/col live fully in SMEM via scalar prefetch and the
        #             (n_pad, 3H) table / (n_pad, H) accumulator stay VMEM-resident;
        #             very large graphs need chunked index DMAs and an HBM-resident
        #             table with manual DMA gathers instead.
        e_out_p, aggr = pl.pallas_call(
            functools.partial(edge_kernel, te=te, out_dim=H, n_real_edges=E,
                              grid_e_per=grid_e_per, compute_dtype=compute_dtype),
            out_shape=(jax.ShapeDtypeStruct((e_pad_n, H), f32),
                       jax.ShapeDtypeStruct((n_split, n_pad, H), f32)),
            grid_spec=pltpu.PrefetchScalarGridSpec(
                num_scalar_prefetch=2,
                grid=(n_split, grid_e_per),
                in_specs=[
                    pl.BlockSpec((te, De),
                                 lambda s, t, r, c: (s * grid_e_per + t, 0)),
                    pl.BlockSpec((De, H), lambda s, t, r, c: (0, 0)),
                    pl.BlockSpec((1, H), lambda s, t, r, c: (0, 0)),
                    pl.BlockSpec((n_pad, 3 * H), lambda s, t, r, c: (0, 0)),
                ],
                out_specs=(
                    pl.BlockSpec((te, H),
                                 lambda s, t, r, c: (s * grid_e_per + t, 0)),
                    pl.BlockSpec((None, n_pad, H), lambda s, t, r, c: (s, 0, 0)),
                ),
                scratch_shapes=[pltpu.VMEM((te, H), f32),       # Dx gather
                                pltpu.VMEM((te, 2 * H), f32),   # [Ex|Bx] gather
                                pltpu.VMEM((te, H), f32)]),     # gated messages
            compiler_params=pltpu.CompilerParams(
                dimension_semantics=("parallel", "arbitrary"),
                vmem_limit_bytes=vmem_limit),
            cost_estimate=pl.CostEstimate(
                flops=2 * e_pad_n * De * H,
                transcendentals=e_pad_n * H,
                bytes_accessed=4 * (e_pad_n * De + De * H + n_pad * 3 * H
                                    + e_pad_n * H + n_split * n_pad * H)),
        )(row_p, col_p, e_p, wc, bc, deb)
        e_final = e_out_p[:E]
    else:
        # PyTorch empty-edge branch: aggr contribution is zero, e output is empty.
        aggr = jnp.zeros((n_split, n_pad, H), f32)
        e_final = jnp.zeros((0, H), f32)

    # ---- K3: node update + FFN ---------------------------------------------------
    x_out = pl.pallas_call(
        functools.partial(node_update_kernel, compute_dtype=compute_dtype),
        out_shape=jax.ShapeDtypeStruct((n_pad, H), f32),
        grid=(grid_n,),
        in_specs=[pl.BlockSpec((tm, D), lambda i: (i, 0)),
                  pl.BlockSpec((tm, H), lambda i: (i, 0)),
                  pl.BlockSpec((n_split, tm, H), lambda i: (0, i, 0)),
                  pl.BlockSpec((H, 2 * H), lambda i: (0, 0)),
                  pl.BlockSpec((1, 2 * H), lambda i: (0, 0)),
                  pl.BlockSpec((2 * H, H), lambda i: (0, 0)),
                  pl.BlockSpec((1, H), lambda i: (0, 0))],
        out_specs=pl.BlockSpec((tm, H), lambda i: (i, 0)),
        compiler_params=node_cparams,
        cost_estimate=pl.CostEstimate(
            flops=2 * n_pad * (H * 2 * H + 2 * H * H), transcendentals=0,
            bytes_accessed=4 * (n_pad * (D + H + (n_split + 1) * H)
                                + H * 2 * H + 2 * H * H)),
    )(x_p, ax, aggr, w1, b1, w2, b2)

    return x_out[:N], e_final


# ---------------------------------------------------------------------------
# Pure-JAX reference of the same forward pass (original [A|B|D|E] param layout)
# ---------------------------------------------------------------------------
def ref_forward(x, e, row, col, params, H):
    hp = lax.Precision.HIGHEST
    proj = jnp.dot(x, params["wn"], precision=hp) + params["bn"][0]
    Ax, Bx, Dx, Exx = (proj[:, i * H:(i + 1) * H] for i in range(4))
    Ce = jnp.dot(e, params["wc"], precision=hp) + params["bc"][0]
    e_ij = Dx[row] + Exx[col] + Ce
    gated = jax.nn.sigmoid(e_ij) * Bx[col]
    aggr = jax.ops.segment_sum(gated, row, num_segments=x.shape[0])
    x_final = x + jax.nn.relu(Ax + aggr)
    e_final = e + jax.nn.relu(e_ij)
    h = jax.nn.relu(jnp.dot(x_final, params["w1"], precision=hp) + params["b1"][0])
    x_final = x_final + jnp.dot(h, params["w2"], precision=hp) + params["b2"][0]
    return x_final, e_final


if __name__ == "__main__":
    # Multi-tile coverage: 2 node tiles (tm=256), 2 splits x 2 edge tiles (te=256).
    N, E, D, H = 300, 700, 128, 128

    key = jax.random.PRNGKey(0)
    keys = jax.random.split(key, 12)
    x = jax.random.normal(keys[0], (N, D), dtype=jnp.float32)
    e = jax.random.normal(keys[1], (E, D), dtype=jnp.float32)
    row = jax.random.randint(keys[2], (E,), 0, N, dtype=jnp.int32)
    col = jax.random.randint(keys[3], (E,), 0, N, dtype=jnp.int32)

    s = 0.1
    params = {
        # Node projections A,B,D,E fused along the output dim: (D, 4H) + (1, 4H)
        "wn": s * jax.random.normal(keys[4], (D, 4 * H), dtype=jnp.float32),
        "bn": s * jax.random.normal(keys[5], (1, 4 * H), dtype=jnp.float32),
        # Edge projection C: (D, H) + (1, H)
        "wc": s * jax.random.normal(keys[6], (D, H), dtype=jnp.float32),
        "bc": s * jax.random.normal(keys[7], (1, H), dtype=jnp.float32),
        # FFN: (H, 2H), (2H, H)
        "w1": s * jax.random.normal(keys[8], (H, 2 * H), dtype=jnp.float32),
        "b1": s * jax.random.normal(keys[9], (1, 2 * H), dtype=jnp.float32),
        "w2": s * jax.random.normal(keys[10], (2 * H, H), dtype=jnp.float32),
        "b2": s * jax.random.normal(keys[11], (1, H), dtype=jnp.float32),
    }

    x_expected, e_expected = ref_forward(x, e, row, col, params, H)

    # f32 MXU path (recommended on v5e): tight correctness check.
    x_out, e_out = gated_gcn_layer(x, e, row, col, params, compute_dtype=jnp.float32)
    jax.block_until_ready((x_out, e_out))
    assert x_out.shape == (N, H) and e_out.shape == (E, H)
    assert jnp.allclose(x_out, x_expected, atol=5e-3, rtol=5e-3)
    assert jnp.allclose(e_out, e_expected, atol=5e-3, rtol=5e-3)

    # bf16 weights / f32 accumulation (v6e/v7x fast path): loose sanity check.
    x_bf, e_bf = gated_gcn_layer(x, e, row, col, params, compute_dtype=jnp.bfloat16)
    jax.block_until_ready((x_bf, e_bf))
    assert jnp.allclose(x_bf, x_expected, atol=3e-1, rtol=1.5e-1)
    assert jnp.allclose(e_bf, e_expected, atol=3e-1, rtol=1.5e-1)

    print("KERNEL_OK")
</pallas_src>

<mosaic_0001>
module attributes {stable_mosaic.version = 11 : i64} {
  func.func @node_proj_kernel(%arg0: i32, %arg1: memref<256x128xf32, #tpu.memory_space<vmem>>, %arg2: memref<128x512xf32, #tpu.memory_space<vmem>>, %arg3: memref<1x512xf32, #tpu.memory_space<vmem>>, %arg4: memref<256x128xf32, #tpu.memory_space<vmem>>, %arg5: memref<256x384xf32, #tpu.memory_space<vmem>>) attributes {dimension_semantics = [#tpu.dimension_semantics<parallel>], iteration_bounds = array<i64: 2>, scalar_prefetch = 0 : i64, scratch_operands = 0 : i64, tpu.core_type = #tpu.core_type<tc>, window_params = [{transform_indices = @transform_0, window_bounds = array<i64: 256, 128>}, {pipeline_mode = #tpu.pipeline_mode<synchronous>, transform_indices = @transform_1, window_bounds = array<i64: 128, 512>}, {pipeline_mode = #tpu.pipeline_mode<synchronous>, transform_indices = @transform_2, window_bounds = array<i64: 1, 512>}, {transform_indices = @transform_3, window_bounds = array<i64: 256, 128>}, {transform_indices = @transform_4, window_bounds = array<i64: 256, 384>}]} {
    %c0 = arith.constant 0 : index
    %c0_0 = arith.constant 0 : index
    %0 = vector.load %arg1[%c0, %c0_0] : memref<256x128xf32, #tpu.memory_space<vmem>>, vector<256x128xf32>
    %c0_1 = arith.constant 0 : index
    %c0_2 = arith.constant 0 : index
    %1 = vector.load %arg2[%c0_1, %c0_2] : memref<128x512xf32, #tpu.memory_space<vmem>>, vector<128x512xf32>
    %cst = arith.constant dense<0.000000e+00> : vector<256x512xf32>
    %2 = tpu.matmul %0, %1, %cst {dimension_numbers = #tpu.dot_dimension_numbers<[1], [0], [0], [1], [0, 0, 1, 1], [], []>} : vector<256x128xf32>, vector<128x512xf32>, vector<256x512xf32> -> vector<256x512xf32>
    %c0_3 = arith.constant 0 : index
    %c0_4 = arith.constant 0 : index
    %3 = vector.load %arg3[%c0_3, %c0_4] : memref<1x512xf32, #tpu.memory_space<vmem>>, vector<1x512xf32>
    %4 = vector.broadcast %3 : vector<1x512xf32> to vector<256x512xf32>
    %5 = arith.addf %2, %4 : vector<256x512xf32>
    %6 = vector.extract_strided_slice %5 {offsets = [0, 0], sizes = [256, 128], strides = [1, 1]} : vector<256x512xf32> to vector<256x128xf32>
    %c0_5 = arith.constant 0 : index
    %c0_6 = arith.constant 0 : index
    %7 = vector.load %arg4[%c0_5, %c0_6] : memref<256x128xf32, #tpu.memory_space<vmem>>, vector<256x128xf32>
    tpu.vector_store %arg4[%c0_5, %c0_6], %6 {strides = array<i32>} : memref<256x128xf32, #tpu.memory_space<vmem>>, vector<256x128xf32>,
    %8 = vector.extract_strided_slice %5 {offsets = [0, 128], sizes = [256, 384], strides = [1, 1]} : vector<256x512xf32> to vector<256x384xf32>
    %c0_7 = arith.constant 0 : index
    %c0_8 = arith.constant 0 : index
    %9 = vector.load %arg5[%c0_7, %c0_8] : memref<256x384xf32, #tpu.memory_space<vmem>>, vector<256x384xf32>
    tpu.vector_store %arg5[%c0_7, %c0_8], %8 {strides = array<i32>} : memref<256x384xf32, #tpu.memory_space<vmem>>, vector<256x384xf32>,
    return
  }
  func.func @transform_0(%arg0: i32) -> (i32, i32) {
    %c0_i32 = arith.constant 0 : i32
    %c0_i32_0 = arith.constant 0 : i32
    return %arg0, %c0_i32 : i32, i32
  }
  func.func @transform_1(%arg0: i32) -> (i32, i32) {
    %c0_i32 = arith.constant 0 : i32
    %c0_i32_0 = arith.constant 0 : i32
    %c0_i32_1 = arith.constant 0 : i32
    return %c0_i32, %c0_i32_0 : i32, i32
  }
  func.func @transform_2(%arg0: i32) -> (i32, i32) {
    %c0_i32 = arith.constant 0 : i32
    %c0_i32_0 = arith.constant 0 : i32
    %c0_i32_1 = arith.constant 0 : i32
    return %c0_i32, %c0_i32_0 : i32, i32
  }
  func.func @transform_3(%arg0: i32) -> (i32, i32) {
    %c0_i32 = arith.constant 0 : i32
    %c0_i32_0 = arith.constant 0 : i32
    return %arg0, %c0_i32 : i32, i32
  }
  func.func @transform_4(%arg0: i32) -> (i32, i32) {
    %c0_i32 = arith.constant 0 : i32
    %c0_i32_0 = arith.constant 0 : i32
    return %arg0, %c0_i32 : i32, i32
  }
}

</mosaic_0001>

<llo_original>
// kernel: tpu_custom_call.1
$region0: #{tpu_custom_call.1}
  #allocation0 [shape = 'u32[]', space=smem, size = 0x4, offset = 0x4, fixed_abs, tag = 'smem constant byte address 0x4 - core index']
  #allocation1 [shape = 'u32[144,128]{1,0:T(1,128)}', space=vmem, size = 0x12000, scoped, tag = 'internal scratch']
  %s0 = inlined_call_operand.hbm [shape: f32[512,128], index: 0, kind: input, shape index: {}]
  %s1 = inlined_call_operand.hbm [shape: f32[128,512], index: 1, kind: input, shape index: {}]
  %s2 = inlined_call_operand.hbm [shape: f32[1,512], index: 2, kind: input, shape index: {}]
  %s3 = inlined_call_operand.hbm [shape: f32[512,128], index: 3, kind: output, shape index: {0}]
  %s4 = inlined_call_operand.hbm [shape: f32[512,384], index: 4, kind: output, shape index: {1}]
  %5 = xla_tuple %s3, %s4
  %s6 = sld [smem:[#allocation0]]
  $region65: #{tpu_custom_call.1} parent=0
    _
  %s8 = ssub.s32 1, %s6
  %s9 = scalar_select 0, %s8, %s6
  $region1: #{tpu_custom_call.1} parent=0
    #allocation2 [shape = 'u8[262144]{0}', space=vmem, size = 0x40000, scoped, tag = 'input window, operand 0']
    #allocation3 [shape = 's32[2]{0}', space=sflag, size = 0x8, scoped, tag = 'scoped memory for tpu_custom_call.1']
    #allocation4 [shape = 's32[2]{0}', space=sflag, size = 0x8, scoped, tag = 'scoped memory for tpu_custom_call.1']
    #allocation5 [shape = 'u8[262144]{0}', space=vmem, size = 0x40000, scoped, tag = 'input window, operand 1, single buffered']
    #allocation6 [shape = 's32[1]{0}', space=sflag, size = 0x4, scoped, tag = 'scoped memory for tpu_custom_call.1']
    #allocation7 [shape = 'u8[2048]{0}', space=vmem, size = 0x800, scoped, tag = 'input window, operand 2, single buffered']
    #allocation8 [shape = 'u8[262144]{0}', space=vmem, size = 0x40000, scoped, tag = 'output window, operand 0']
    #allocation9 [shape = 'u8[786432]{0}', space=vmem, size = 0xc0000, scoped, tag = 'output window, operand 1']
    #allocation10 [shape = 's32[2]{0}', space=sflag, size = 0x8, scoped, tag = 'scoped memory for tpu_custom_call.1']
    %10 = vsyncpa [#allocation3], 0
    %s11 = scalar_lea.sflag [#allocation3], 1
    %12 = vsyncpa %s11, 0
    %13 = vsyncpa [#allocation6], 0
    %14 = vsyncpa [#allocation4], 0
    %s15 = scalar_lea.sflag [#allocation4], 1
    %16 = vsyncpa %s15, 0
    %17 = vsyncpa [#allocation10], 0
    %s18 = scalar_lea.sflag [#allocation10], 1
    %19 = vsyncpa %s18, 0
    loop: start=0, step=1, limit=4
    $region2: #{tpu_custom_call.1} parent=1 // loop_pre_header
      _
    $region3: #{tpu_custom_call.1} parent=1 // loop_header
      %s21 = sphi 0, %s25
      %p22 = scmp.ge.s32.totalorder %s21, 4
      %s31 = sphi 0, %s33
      %s34 = sphi 0, %s31
      %s35 = sphi 0, %s34
      %s51 = sphi 0, %s35
      %s55 = sphi 0, %s55
      %s57 = sphi 0, %s55
      %s58 = sphi 0, %s57
      %s72 = sphi 0, %s58
      %s76 = sphi 0, %s76
      %s78 = sphi 0, %s76
      %s79 = sphi 0, %s78
      %s93 = sphi 0, %s79
      %s99 = sphi 0, %s101
      %s102 = sphi 0, %s99
      %s103 = sphi 0, %s102
      %s119 = sphi 0, %s103
      %s125 = sphi 0, %s127
      %s128 = sphi 0, %s125
      %s129 = sphi 0, %s128
      %s145 = sphi 0, %s129
    $region4: #{tpu_custom_call.1} parent=1 // loop_header_branch
      %24 = sbr.rel (%p22) target = $region8
    $region5: #{tpu_custom_call.1} parent=1 // loop_body
      %s26 = ssub.s32 %s21, 1
      %s27 = ssub.s32 %s21, 2
      %s28 = sadd.s32 %s21, 1
      %s29 = ssub.s32 %s21, %s28
      %p30 = scmp.eq.s32.totalorder %s29, 0
      %s32 = sadd.s32 %s31, 1
      %s33 = scalar_select %p30, %s31, %s32
      %p36 = pneg %p30
      %p37 = scmp.eq.s32.totalorder %s21, 1
      %p38 = por %p36, %p37
      %p39 = scmp.ne.s32.totalorder %s31, %s34
      %p40 = scmp.eq.s32.totalorder %s21, 0
      %p41 = por %p39, %p40
      %p42 = scmp.ne.s32.totalorder %s31, %s34
      %p43 = scmp.eq.s32.totalorder %s26, 1
      %p44 = por %p42, %p43
      %p45 = scmp.ne.s32.totalorder %s34, %s35
      %p46 = scmp.eq.s32.totalorder %s26, 0
      %p47 = por %p45, %p46
      %p48 = scmp.ne.s32.totalorder %s34, %s35
      %p49 = scmp.eq.s32.totalorder %s27, 1
      %p50 = por %p48, %p49
      %p52 = scmp.ne.s32.totalorder %s35, %s51
      %p53 = scmp.eq.s32.totalorder %s27, 0
      %p54 = por %p52, %p53
      %s56 = sadd.s32 %s55, 1
      %p59 = scmp.eq.s32.totalorder %s21, 1
      %p60 = scmp.ne.s32.totalorder %s55, %s57
      %p61 = scmp.eq.s32.totalorder %s21, 0
      %p62 = por %p60, %p61
      %p63 = scmp.ne.s32.totalorder %s55, %s57
      %p64 = scmp.eq.s32.totalorder %s26, 1
      %p65 = por %p63, %p64
      %p66 = scmp.ne.s32.totalorder %s57, %s58
      %p67 = scmp.eq.s32.totalorder %s26, 0
      %p68 = por %p66, %p67
      %p69 = scmp.ne.s32.totalorder %s57, %s58
      %p70 = scmp.eq.s32.totalorder %s27, 1
      %p71 = por %p69, %p70
      %p73 = scmp.ne.s32.totalorder %s58, %s72
      %p74 = scmp.eq.s32.totalorder %s27, 0
      %p75 = por %p73, %p74
      %s77 = sadd.s32 %s76, 1
      %p80 = scmp.eq.s32.totalorder %s21, 1
      %p81 = scmp.ne.s32.totalorder %s76, %s78
      %p82 = scmp.eq.s32.totalorder %s21, 0
      %p83 = por %p81, %p82
      %p84 = scmp.ne.s32.totalorder %s76, %s78
      %p85 = scmp.eq.s32.totalorder %s26, 1
      %p86 = por %p84, %p85
      %p87 = scmp.ne.s32.totalorder %s78, %s79
      %p88 = scmp.eq.s32.totalorder %s26, 0
      %p89 = por %p87, %p88
      %p90 = scmp.ne.s32.totalorder %s78, %s79
      %p91 = scmp.eq.s32.totalorder %s27, 1
      %p92 = por %p90, %p91
      %p94 = scmp.ne.s32.totalorder %s79, %s93
      %p95 = scmp.eq.s32.totalorder %s27, 0
      %p96 = por %p94, %p95
      %s97 = ssub.s32 %s21, %s28
      %p98 = scmp.eq.s32.totalorder %s97, 0
      %s100 = sadd.s32 %s99, 1
      %s101 = scalar_select %p98, %s99, %s100
      %p104 = pneg %p98
      %p105 = scmp.eq.s32.totalorder %s21, 1
      %p106 = por %p104, %p105
      %p107 = scmp.ne.s32.totalorder %s99, %s102
      %p108 = scmp.eq.s32.totalorder %s21, 0
      %p109 = por %p107, %p108
      %p110 = scmp.ne.s32.totalorder %s99, %s102
      %p111 = scmp.eq.s32.totalorder %s26, 1
      %p112 = por %p110, %p111
      %p113 = scmp.ne.s32.totalorder %s102, %s103
      %p114 = scmp.eq.s32.totalorder %s26, 0
      %p115 = por %p113, %p114
      %p116 = scmp.ne.s32.totalorder %s102, %s103
      %p117 = scmp.eq.s32.totalorder %s27, 1
      %p118 = por %p116, %p117
      %p120 = scmp.ne.s32.totalorder %s103, %s119
      %p121 = scmp.eq.s32.totalorder %s27, 0
      %p122 = por %p120, %p121
      %s123 = ssub.s32 %s21, %s28
      %p124 = scmp.eq.s32.totalorder %s123, 0
      %s126 = sadd.s32 %s125, 1
      %s127 = scalar_select %p124, %s125, %s126
      %p130 = pneg %p124
      %p131 = scmp.eq.s32.totalorder %s21, 1
      %p132 = por %p130, %p131
      %p133 = scmp.ne.s32.totalorder %s125, %s128
      %p134 = scmp.eq.s32.totalorder %s21, 0
      %p135 = por %p133, %p134
      %p136 = scmp.ne.s32.totalorder %s125, %s128
      %p137 = scmp.eq.s32.totalorder %s26, 1
      %p138 = por %p136, %p137
      %p139 = scmp.ne.s32.totalorder %s128, %s129
      %p140 = scmp.eq.s32.totalorder %s26, 0
      %p141 = por %p139, %p140
      %p142 = scmp.ne.s32.totalorder %s128, %s129
      %p143 = scmp.eq.s32.totalorder %s27, 1
      %p144 = por %p142, %p143
      %p146 = scmp.ne.s32.totalorder %s129, %s145
      %p147 = scmp.eq.s32.totalorder %s27, 0
      %p148 = por %p146, %p147
      %p149 = scmp.le.s32.totalorder 1, %s21
      %p150 = scmp.lt.s32.totalorder %s21, 3
      %p151 = pnand %p149, %p150
      %p152 = pneg %p151
      // Predicated region
      $region9: #{tpu_custom_call.1} parent=5 // pred_check
        _
      $region10: #{tpu_custom_call.1} parent=5 // pred_check_branch
        %154 = sbr.rel (%p151) target = $region12
      $region11: #{tpu_custom_call.1} parent=5 // pred_region
        %s155 = ssub.s32 %s21, 1
        // Predicated region
        $region13: #{tpu_custom_call.1} parent=11 // pred_check
          %p156 = pneg %p68
        $region14: #{tpu_custom_call.1} parent=11 // pred_check_branch
          %158 = sbr.rel (%p156) target = $region16
        $region15: #{tpu_custom_call.1} parent=11 // pred_region
          %s160 = ssub.s32 8192, 8192
          %161 = vsyncadd [#allocation6], %s160
          %s162 = sshll.u32 [#allocation5], 4
          %s163 = int_to_ptr.vmem [resolvable:$true] %s162
          %168 = dma.hbm_to_vmem [thread:$0]  %s1, 8192, %s163, [#allocation6], 512, 512, 32
        $region16: #{tpu_custom_call.1} parent=11 // pred_fallthru
          _
        // Predicated region
        $region17: #{tpu_custom_call.1} parent=11 // pred_check
          %p169 = pneg %p89
        $region18: #{tpu_custom_call.1} parent=11 // pred_check_branch
          %171 = sbr.rel (%p169) target = $region20
        $region19: #{tpu_custom_call.1} parent=11 // pred_region
          %s173 = ssub.s32 64, 64
          %174 = vsyncadd [#allocation6], %s173
          %s176 = sshll.u32 [#allocation7], 4
          %s177 = int_to_ptr.vmem [resolvable:$true] %s176
          %179 = dma.hbm_to_vmem [thread:$0]  %s2, 64, %s177, [#allocation6]
        $region20: #{tpu_custom_call.1} parent=11 // pred_fallthru
          _
      $region12: #{tpu_custom_call.1} parent=5 // pred_fallthru
        _
      %p180 = scmp.lt.s32.totalorder %s21, 2
      // Predicated region
      $region21: #{tpu_custom_call.1} parent=5 // pred_check
        %p181 = pneg %p180
      $region22: #{tpu_custom_call.1} parent=5 // pred_check_branch
        %183 = sbr.rel (%p181) target = $region24
      $region23: #{tpu_custom_call.1} parent=5 // pred_region
        // Predicated region
        $region25: #{tpu_custom_call.1} parent=23 // pred_check
          %p184 = pneg %p41
        $region26: #{tpu_custom_call.1} parent=23 // pred_check_branch
          %186 = sbr.rel (%p184) target = $region28
        $region27: #{tpu_custom_call.1} parent=23 // pred_region
          %s187 = sand.u32 %s31, 1
          %s188 = scalar_lea.sflag [#allocation3], %s187
          %s189 = sand.u32 %s31, 1
          %s190 = smul.addr %s189, 256
          %s191 = scalar_lea.vmem [#allocation2], %s190
          %s192 = smul.u32 32, %s21
          %s194 = ssub.s32 4096, 4096
          %195 = vsyncadd %s188, %s194
          %s196 = smul.addr %s192, 128
          %s197 = scalar_lea.hbm %s0, %s196
          %s198 = sshll.u32 %s191, 4
          %s199 = int_to_ptr.vmem [resolvable:$true] %s198
          %204 = dma.hbm_to_vmem [thread:$0]  %s197, 4096, %s199, %s188, 128, 128, 8
        $region28: #{tpu_custom_call.1} parent=23 // pred_fallthru
          _
      $region24: #{tpu_custom_call.1} parent=5 // pred_fallthru
        _
      %p205 = scmp.le.s32.totalorder 1, %s21
      %p206 = scmp.lt.s32.totalorder %s21, 3
      %p207 = pnand %p205, %p206
      %p208 = pneg %p207
      // Predicated region
      $region29: #{tpu_custom_call.1} parent=5 // pred_check
        _
      $region30: #{tpu_custom_call.1} parent=5 // pred_check_branch
        %210 = sbr.rel (%p207) target = $region32
      $region31: #{tpu_custom_call.1} parent=5 // pred_region
        %s211 = ssub.s32 %s21, 1
        %s212 = sand.u32 %s34, 1
        %s213 = scalar_lea.sflag [#allocation3], %s212
        %s214 = sand.u32 %s34, 1
        %s215 = smul.addr %s214, 256
        %s216 = scalar_lea.vmem [#allocation2], %s215
        // Predicated region
        $region33: #{tpu_custom_call.1} parent=31 // pred_check
          %p217 = pneg %p47
        $region34: #{tpu_custom_call.1} parent=31 // pred_check_branch
          %219 = sbr.rel (%p217) target = $region36
        $region35: #{tpu_custom_call.1} parent=31 // pred_region
          %220 = dma.done %s213, 4096
        $region36: #{tpu_custom_call.1} parent=31 // pred_fallthru
          _
        // Predicated region
        $region37: #{tpu_custom_call.1} parent=31 // pred_check
          %p221 = pneg %p68
        $region38: #{tpu_custom_call.1} parent=31 // pred_check_branch
          %223 = sbr.rel (%p221) target = $region40
        $region39: #{tpu_custom_call.1} parent=31 // pred_region
          %224 = dma.done [#allocation6], 8192
        $region40: #{tpu_custom_call.1} parent=31 // pred_fallthru
          _
        // Predicated region
        $region41: #{tpu_custom_call.1} parent=31 // pred_check
          %p225 = pneg %p89
        $region42: #{tpu_custom_call.1} parent=31 // pred_check_branch
          %227 = sbr.rel (%p225) target = $region44
        $region43: #{tpu_custom_call.1} parent=31 // pred_region
          %228 = dma.done [#allocation6], 64
        $region44: #{tpu_custom_call.1} parent=31 // pred_fallthru
          _
        %s229 = sand.u32 %s34, 1
        %s230 = scalar_lea.sflag [#allocation3], %s229
        %s231 = sand.u32 %s34, 1
        %s232 = smul.addr %s231, 256
        %s233 = scalar_lea.vmem [#allocation2], %s232
        %p234 = pneg %p47
        %p235 = pneg %p44
        %p236 = pneg %p68
        %p237 = pneg %p65
        %p238 = pneg %p89
        %p239 = pneg %p86
        %p240 = pneg %p115
        %p241 = pneg %p112
        %s242 = sand.u32 %s102, 1
        %s243 = scalar_lea.sflag [#allocation4], %s242
        %s244 = sand.u32 %s102, 1
        %s245 = smul.addr %s244, 256
        %s246 = scalar_lea.vmem [#allocation8], %s245
        %p247 = pneg %p141
        %p248 = pneg %p138
        %s249 = sand.u32 %s128, 1
        %s250 = scalar_lea.sflag [#allocation10], %s249
        %s251 = sand.u32 %s128, 1
        %s252 = smul.addr %s251, 768
        %s253 = scalar_lea.vmem [#allocation9], %s252
        %s254 = smul.u32 32, %s26
        %s255 = smul.u32 32, %s26
        %s256 = smul.u32 32, %s26
        %v257 = vld [vmem:[%s216] sm:$0xff]
        %v258 = vld [vmem:[%s216 + $0x8] sm:$0xff]
        %v259 = vld [vmem:[%s216 + $0x10] sm:$0xff]
        %v260 = vld [vmem:[%s216 + $0x18] sm:$0xff]
        %v261 = vld [vmem:[%s216 + $0x20] sm:$0xff]
        %v262 = vld [vmem:[%s216 + $0x28] sm:$0xff]
        %v263 = vld [vmem:[%s216 + $0x30] sm:$0xff]
        %v264 = vld [vmem:[%s216 + $0x38] sm:$0xff]
        %v265 = vld [vmem:[%s216 + $0x40] sm:$0xff]
        %v266 = vld [vmem:[%s216 + $0x48] sm:$0xff]
        %v267 = vld [vmem:[%s216 + $0x50] sm:$0xff]
        %v268 = vld [vmem:[%s216 + $0x58] sm:$0xff]
        %v269 = vld [vmem:[%s216 + $0x60] sm:$0xff]
        %v270 = vld [vmem:[%s216 + $0x68] sm:$0xff]
        %v271 = vld [vmem:[%s216 + $0x70] sm:$0xff]
        %v272 = vld [vmem:[%s216 + $0x78] sm:$0xff]
        %v273 = vld [vmem:[%s216 + $0x80] sm:$0xff]
        %v274 = vld [vmem:[%s216 + $0x88] sm:$0xff]
        %v275 = vld [vmem:[%s216 + $0x90] sm:$0xff]
        %v276 = vld [vmem:[%s216 + $0x98] sm:$0xff]
        %v277 = vld [vmem:[%s216 + $0xa0] sm:$0xff]
        %v278 = vld [vmem:[%s216 + $0xa8] sm:$0xff]
        %v279 = vld [vmem:[%s216 + $0xb0] sm:$0xff]
        %v280 = vld [vmem:[%s216 + $0xb8] sm:$0xff]
        %v281 = vld [vmem:[%s216 + $0xc0] sm:$0xff]
        %v282 = vld [vmem:[%s216 + $0xc8] sm:$0xff]
        %v283 = vld [vmem:[%s216 + $0xd0] sm:$0xff]
        %v284 = vld [vmem:[%s216 + $0xd8] sm:$0xff]
        %v285 = vld [vmem:[%s216 + $0xe0] sm:$0xff]
        %v286 = vld [vmem:[%s216 + $0xe8] sm:$0xff]
        %v287 = vld [vmem:[%s216 + $0xf0] sm:$0xff]
        %v288 = vld [vmem:[%s216 + $0xf8] sm:$0xff]
        %v289 = vld [vmem:[#allocation5] sm:$0xff]
        %v290 = vld [vmem:[#allocation5 + $0x8] sm:$0xff]
        %v291 = vld [vmem:[#allocation5 + $0x10] sm:$0xff]
        %v292 = vld [vmem:[#allocation5 + $0x18] sm:$0xff]
        %v293 = vld [vmem:[#allocation5 + $0x20] sm:$0xff]
        %v294 = vld [vmem:[#allocation5 + $0x28] sm:$0xff]
        %v295 = vld [vmem:[#allocation5 + $0x30] sm:$0xff]
        %v296 = vld [vmem:[#allocation5 + $0x38] sm:$0xff]
        %v297 = vld [vmem:[#allocation5 + $0x40] sm:$0xff]
        %v298 = vld [vmem:[#allocation5 + $0x48] sm:$0xff]
        %v299 = vld [vmem:[#allocation5 + $0x50] sm:$0xff]
        %v300 = vld [vmem:[#allocation5 + $0x58] sm:$0xff]
        %v301 = vld [vmem:[#allocation5 + $0x60] sm:$0xff]
        %v302 = vld [vmem:[#allocation5 + $0x68] sm:$0xff]
        %v303 = vld [vmem:[#allocation5 + $0x70] sm:$0xff]
        %v304 = vld [vmem:[#allocation5 + $0x78] sm:$0xff]
        %v305 = vld [vmem:[#allocation5 + $0x80] sm:$0xff]
        %v306 = vld [vmem:[#allocation5 + $0x88] sm:$0xff]
        %v307 = vld [vmem:[#allocation5 + $0x90] sm:$0xff]
        %v308 = vld [vmem:[#allocation5 + $0x98] sm:$0xff]
        %v309 = vld [vmem:[#allocation5 + $0xa0] sm:$0xff]
        %v310 = vld [vmem:[#allocation5 + $0xa8] sm:$0xff]
        %v311 = vld [vmem:[#allocation5 + $0xb0] sm:$0xff]
        %v312 = vld [vmem:[#allocation5 + $0xb8] sm:$0xff]
        %v313 = vld [vmem:[#allocation5 + $0xc0] sm:$0xff]
        %v314 = vld [vmem:[#allocation5 + $0xc8] sm:$0xff]
        %v315 = vld [vmem:[#allocation5 + $0xd0] sm:$0xff]
        %v316 = vld [vmem:[#allocation5 + $0xd8] sm:$0xff]
        %v317 = vld [vmem:[#allocation5 + $0xe0] sm:$0xff]
        %v318 = vld [vmem:[#allocation5 + $0xe8] sm:$0xff]
        %v319 = vld [vmem:[#allocation5 + $0xf0] sm:$0xff]
        %v320 = vld [vmem:[#allocation5 + $0xf8] sm:$0xff]
        %v321 = vld [vmem:[#allocation5 + $0x100] sm:$0xff]
        %v322 = vld [vmem:[#allocation5 + $0x108] sm:$0xff]
        %v323 = vld [vmem:[#allocation5 + $0x110] sm:$0xff]
        %v324 = vld [vmem:[#allocation5 + $0x118] sm:$0xff]
        %v325 = vld [vmem:[#allocation5 + $0x120] sm:$0xff]
        %v326 = vld [vmem:[#allocation5 + $0x128] sm:$0xff]
        %v327 = vld [vmem:[#allocation5 + $0x130] sm:$0xff]
        %v328 = vld [vmem:[#allocation5 + $0x138] sm:$0xff]
        %v329 = vld [vmem:[#allocation5 + $0x140] sm:$0xff]
        %v330 = vld [vmem:[#allocation5 + $0x148] sm:$0xff]
        %v331 = vld [vmem:[#allocation5 + $0x150] sm:$0xff]
        %v332 = vld [vmem:[#allocation5 + $0x158] sm:$0xff]
        %v333 = vld [vmem:[#allocation5 + $0x160] sm:$0xff]
        %v334 = vld [vmem:[#allocation5 + $0x168] sm:$0xff]
        %v335 = vld [vmem:[#allocation5 + $0x170] sm:$0xff]
        %v336 = vld [vmem:[#allocation5 + $0x178] sm:$0xff]
        %v337 = vld [vmem:[#allocation5 + $0x180] sm:$0xff]
        %v338 = vld [vmem:[#allocation5 + $0x188] sm:$0xff]
        %v339 = vld [vmem:[#allocation5 + $0x190] sm:$0xff]
        %v340 = vld [vmem:[#allocation5 + $0x198] sm:$0xff]
        %v341 = vld [vmem:[#allocation5 + $0x1a0] sm:$0xff]
        %v342 = vld [vmem:[#allocation5 + $0x1a8] sm:$0xff]
        %v343 = vld [vmem:[#allocation5 + $0x1b0] sm:$0xff]
        %v344 = vld [vmem:[#allocation5 + $0x1b8] sm:$0xff]
        %v345 = vld [vmem:[#allocation5 + $0x1c0] sm:$0xff]
        %v346 = vld [vmem:[#allocation5 + $0x1c8] sm:$0xff]
        %v347 = vld [vmem:[#allocation5 + $0x1d0] sm:$0xff]
        %v348 = vld [vmem:[#allocation5 + $0x1d8] sm:$0xff]
        %v349 = vld [vmem:[#allocation5 + $0x1e0] sm:$0xff]
        %v350 = vld [vmem:[#allocation5 + $0x1e8] sm:$0xff]
        %v351 = vld [vmem:[#allocation5 + $0x1f0] sm:$0xff]
        %v352 = vld [vmem:[#allocation5 + $0x1f8] sm:$0xff]
        %v353 = vld [vmem:[#allocation7] sm:$0xf]
        %v355 = vlaneseq
        %v356 = vshrl.u32 %v355, 7
        %v357 = vsub.s32 0, %v356
        %v358 = vrot.slane %v353, %v357
        %v359 = vlaneseq
        %v360 = vshrl.u32 %v359, 7
        %v361 = vsub.s32 1, %v360
        %v362 = vrot.slane %v353, %v361
        %v363 = vlaneseq
        %v364 = vshrl.u32 %v363, 7
        %v365 = vsub.s32 2, %v364
        %v366 = vrot.slane %v353, %v365
        %v367 = vlaneseq
        %v368 = vshrl.u32 %v367, 7
        %v369 = vsub.s32 3, %v368
        %v370 = vrot.slane %v353, %v369
        %375 = vmatprep.subr.mxu0 %v350
        %376 = vmatpush1.msra.mxu0 %v349
        %377 = vmatprep.subr.mxu0 %v346
        %378 = vmatpush1.msra.mxu0 %v345
        %379 = vmatprep.subr.mxu0 %v342
        %380 = vmatpush1.msra.mxu0 %v341
        %381 = vmatprep.subr.mxu0 %v338
        %382 = vmatpush1.msra.mxu0 %v337
        %383 = vmatprep.subr.mxu0 %v334
        %384 = vmatpush1.msra.mxu0 %v333
        %385 = vmatprep.subr.mxu0 %v330
        %386 = vmatpush1.msra.mxu0 %v329
        %387 = vmatprep.subr.mxu0 %v326
        %388 = vmatpush1.msra.mxu0 %v325
        %389 = vmatprep.subr.mxu0 %v322
        %390 = vmatpush1.msra.mxu0 %v321
        %391 = vmatprep.subr.mxu0 %v318
        %392 = vmatpush1.msra.mxu0 %v317
        %393 = vmatprep.subr.mxu0 %v314
        %394 = vmatpush1.msra.mxu0 %v313
        %395 = vmatprep.subr.mxu0 %v310
        %396 = vmatpush1.msra.mxu0 %v309
        %397 = vmatprep.subr.mxu0 %v306
        %398 = vmatpush1.msra.mxu0 %v305
        %399 = vmatprep.subr.mxu0 %v302
        %400 = vmatpush1.msra.mxu0 %v301
        %401 = vmatprep.subr.mxu0 %v298
        %402 = vmatpush1.msra.mxu0 %v297
        %403 = vmatprep.subr.mxu0 %v294
        %404 = vmatpush1.msra.mxu0 %v293
        %405 = vmatprep.subr.mxu0 %v290
        %406 = vmatpush1.msra.mxu0 %v289
        %407 = vmatprep.subr.mxu0 0.0
        %408 = vmatpush2.msra.mxu0 0.0
        %409 = vmatprep.subr.mxu0 0.0
        %410 = vmatpush2.msra.mxu0 0.0
        %411 = vmatprep.subr.mxu0 0.0
        %412 = vmatpush2.msra.mxu0 0.0
        %413 = vmatprep.subr.mxu0 0.0
        %414 = vmatpush2.msra.mxu0 0.0
        %415 = vmatprep.subr.mxu0 0.0
        %416 = vmatpush2.msra.mxu0 0.0
        %417 = vmatprep.subr.mxu0 0.0
        %418 = vmatpush2.msra.mxu0 0.0
        %419 = vmatprep.subr.mxu0 0.0
        %420 = vmatpush2.msra.mxu0 0.0
        %421 = vmatprep.subr.mxu0 0.0
        %422 = vmatpush2.msra.mxu0 0.0
        %423 = vmatprep.subr.mxu0 0.0
        %424 = vmatpush2.msra.mxu0 0.0
        %425 = vmatprep.subr.mxu0 0.0
        %426 = vmatpush2.msra.mxu0 0.0
        %427 = vmatprep.subr.mxu0 0.0
        %428 = vmatpush2.msra.mxu0 0.0
        %429 = vmatprep.subr.mxu0 0.0
        %430 = vmatpush2.msra.mxu0 0.0
        %431 = vmatprep.subr.mxu0 0.0
        %432 = vmatpush2.msra.mxu0 0.0
        %433 = vmatprep.subr.mxu0 0.0
        %434 = vmatpush2.msra.mxu0 0.0
        %435 = vmatprep.subr.mxu0 0.0
        %436 = vmatpush2.msra.mxu0 0.0
        %437 = vmatprep.subr.mxu0 0.0
        %438 = vmatpush2.msra.mxu0 0.0
        %439 = vmatprep.mubr.f32.mxu0 0.0
        %440 = vmatmul.mubr.f32.gmra.mxu0 %v257
        %v441 = vpop.f32.mrf.mxu0
        %v442 = vadd.f32 %v358, %v441
        %v443 = vpop.f32.mrf.mxu0
        %v444 = vadd.f32 %v362, %v443
        %445 = vmatprep.mubr.f32.mxu0 0.0
        %446 = vmatmul.mubr.f32.gmra.mxu0 %v258
        %v447 = vpop.f32.mrf.mxu0
        %v448 = vadd.f32 %v358, %v447
        %v449 = vpop.f32.mrf.mxu0
        %v450 = vadd.f32 %v362, %v449
        %451 = vmatprep.mubr.f32.mxu0 0.0
        %452 = vmatmul.mubr.f32.gmra.mxu0 %v259
        %v453 = vpop.f32.mrf.mxu0
        %v454 = vadd.f32 %v358, %v453
        %v455 = vpop.f32.mrf.mxu0
        %v456 = vadd.f32 %v362, %v455
        %457 = vmatprep.mubr.f32.mxu0 0.0
        %458 = vmatmul.mubr.f32.gmra.mxu0 %v260
        %v459 = vpop.f32.mrf.mxu0
        %v460 = vadd.f32 %v358, %v459
        %v461 = vpop.f32.mrf.mxu0
        %v462 = vadd.f32 %v362, %v461
        %463 = vmatprep.mubr.f32.mxu0 0.0
        %464 = vmatmul.mubr.f32.gmra.mxu0 %v261
        %v465 = vpop.f32.mrf.mxu0
        %v466 = vadd.f32 %v358, %v465
        %v467 = vpop.f32.mrf.mxu0
        %v468 = vadd.f32 %v362, %v467
        %469 = vmatprep.mubr.f32.mxu0 0.0
        %470 = vmatmul.mubr.f32.gmra.mxu0 %v262
        %v471 = vpop.f32.mrf.mxu0
        %v472 = vadd.f32 %v358, %v471
        %v473 = vpop.f32.mrf.mxu0
        %v474 = vadd.f32 %v362, %v473
        %475 = vmatprep.mubr.f32.mxu0 0.0
        %476 = vmatmul.mubr.f32.gmra.mxu0 %v263
        %v477 = vpop.f32.mrf.mxu0
        %v478 = vadd.f32 %v358, %v477
        %v479 = vpop.f32.mrf.mxu0
        %v480 = vadd.f32 %v362, %v479
        %481 = vmatprep.mubr.f32.mxu0 0.0
        %482 = vmatmul.mubr.f32.gmra.mxu0 %v264
        %v483 = vpop.f32.mrf.mxu0
        %v484 = vadd.f32 %v358, %v483
        %v485 = vpop.f32.mrf.mxu0
        %v486 = vadd.f32 %v362, %v485
        %487 = vmatprep.mubr.f32.mxu0 0.0
        %488 = vmatmul.mubr.f32.gmra.mxu0 %v265
        %v489 = vpop.f32.mrf.mxu0
        %v490 = vadd.f32 %v358, %v489
        %v491 = vpop.f32.mrf.mxu0
        %v492 = vadd.f32 %v362, %v491
        %493 = vmatprep.mubr.f32.mxu0 0.0
        %494 = vmatmul.mubr.f32.gmra.mxu0 %v266
        %v495 = vpop.f32.mrf.mxu0
        %v496 = vadd.f32 %v358, %v495
        %v497 = vpop.f32.mrf.mxu0
        %v498 = vadd.f32 %v362, %v497
        %499 = vmatprep.mubr.f32.mxu0 0.0
        %500 = vmatmul.mubr.f32.gmra.mxu0 %v267
        %v501 = vpop.f32.mrf.mxu0
        %v502 = vadd.f32 %v358, %v501
        %v503 = vpop.f32.mrf.mxu0
        %v504 = vadd.f32 %v362, %v503
        %505 = vmatprep.mubr.f32.mxu0 0.0
        %506 = vmatmul.mubr.f32.gmra.mxu0 %v268
        %v507 = vpop.f32.mrf.mxu0
        %v508 = vadd.f32 %v358, %v507
        %v509 = vpop.f32.mrf.mxu0
        %v510 = vadd.f32 %v362, %v509
        %511 = vmatprep.mubr.f32.mxu0 0.0
        %512 = vmatmul.mubr.f32.gmra.mxu0 %v269
        %v513 = vpop.f32.mrf.mxu0
        %v514 = vadd.f32 %v358, %v513
        %v515 = vpop.f32.mrf.mxu0
        %v516 = vadd.f32 %v362, %v515
        %517 = vmatprep.mubr.f32.mxu0 0.0
        %518 = vmatmul.mubr.f32.gmra.mxu0 %v270
        %v519 = vpop.f32.mrf.mxu0
        %v520 = vadd.f32 %v358, %v519
        %v521 = vpop.f32.mrf.mxu0
        %v522 = vadd.f32 %v362, %v521
        %523 = vmatprep.mubr.f32.mxu0 0.0
        %524 = vmatmul.mubr.f32.gmra.mxu0 %v271
        %v525 = vpop.f32.mrf.mxu0
        %v526 = vadd.f32 %v358, %v525
        %v527 = vpop.f32.mrf.mxu0
        %v528 = vadd.f32 %v362, %v527
        %529 = vmatprep.mubr.f32.mxu0 0.0
        %530 = vmatmul.mubr.f32.gmra.mxu0 %v272
        %v531 = vpop.f32.mrf.mxu0
        %v532 = vadd.f32 %v358, %v531
        %v533 = vpop.f32.mrf.mxu0
        %v534 = vadd.f32 %v362, %v533
        %535 = vmatprep.mubr.f32.mxu0 0.0
        %536 = vmatmul.mubr.f32.gmra.mxu0 %v273
        %v537 = vpop.f32.mrf.mxu0
        %v538 = vadd.f32 %v358, %v537
        %v539 = vpop.f32.mrf.mxu0
        %v540 = vadd.f32 %v362, %v539
        %541 = vmatprep.mubr.f32.mxu0 0.0
        %542 = vmatmul.mubr.f32.gmra.mxu0 %v274
        %v543 = vpop.f32.mrf.mxu0
        %v544 = vadd.f32 %v358, %v543
        %v545 = vpop.f32.mrf.mxu0
        %v546 = vadd.f32 %v362, %v545
        %547 = vmatprep.mubr.f32.mxu0 0.0
        %548 = vmatmul.mubr.f32.gmra.mxu0 %v275
        %v549 = vpop.f32.mrf.mxu0
        %v550 = vadd.f32 %v358, %v549
        %v551 = vpop.f32.mrf.mxu0
        %v552 = vadd.f32 %v362, %v551
        %553 = vmatprep.mubr.f32.mxu0 0.0
        %554 = vmatmul.mubr.f32.gmra.mxu0 %v276
        %v555 = vpop.f32.mrf.mxu0
        %v556 = vadd.f32 %v358, %v555
        %v557 = vpop.f32.mrf.mxu0
        %v558 = vadd.f32 %v362, %v557
        %559 = vmatprep.mubr.f32.mxu0 0.0
        %560 = vmatmul.mubr.f32.gmra.mxu0 %v277
        %v561 = vpop.f32.mrf.mxu0
        %v562 = vadd.f32 %v358, %v561
        %v563 = vpop.f32.mrf.mxu0
        %v564 = vadd.f32 %v362, %v563
        %565 = vmatprep.mubr.f32.mxu0 0.0
        %566 = vmatmul.mubr.f32.gmra.mxu0 %v278
        %v567 = vpop.f32.mrf.mxu0
        %v568 = vadd.f32 %v358, %v567
        %v569 = vpop.f32.mrf.mxu0
        %v570 = vadd.f32 %v362, %v569
        %571 = vmatprep.mubr.f32.mxu0 0.0
        %572 = vmatmul.mubr.f32.gmra.mxu0 %v279
        %v573 = vpop.f32.mrf.mxu0
        %v574 = vadd.f32 %v358, %v573
        %v575 = vpop.f32.mrf.mxu0
        %v576 = vadd.f32 %v362, %v575
        %577 = vmatprep.mubr.f32.mxu0 0.0
        %578 = vmatmul.mubr.f32.gmra.mxu0 %v280
        %v579 = vpop.f32.mrf.mxu0
        %v580 = vadd.f32 %v358, %v579
        %v581 = vpop.f32.mrf.mxu0
        %v582 = vadd.f32 %v362, %v581
        %583 = vmatprep.mubr.f32.mxu0 0.0
        %584 = vmatmul.mubr.f32.gmra.mxu0 %v281
        %v585 = vpop.f32.mrf.mxu0
        %v586 = vadd.f32 %v358, %v585
        %v587 = vpop.f32.mrf.mxu0
        %v588 = vadd.f32 %v362, %v587
        %589 = vmatprep.mubr.f32.mxu0 0.0
        %590 = vmatmul.mubr.f32.gmra.mxu0 %v282
        %v591 = vpop.f32.mrf.mxu0
        %v592 = vadd.f32 %v358, %v591
        %v593 = vpop.f32.mrf.mxu0
        %v594 = vadd.f32 %v362, %v593
        %595 = vmatprep.mubr.f32.mxu0 0.0
        %596 = vmatmul.mubr.f32.gmra.mxu0 %v283
        %v597 = vpop.f32.mrf.mxu0
        %v598 = vadd.f32 %v358, %v597
        %v599 = vpop.f32.mrf.mxu0
        %v600 = vadd.f32 %v362, %v599
        %601 = vmatprep.mubr.f32.mxu0 0.0
        %602 = vmatmul.mubr.f32.gmra.mxu0 %v284
        %v603 = vpop.f32.mrf.mxu0
        %v604 = vadd.f32 %v358, %v603
        %v605 = vpop.f32.mrf.mxu0
        %v606 = vadd.f32 %v362, %v605
        %607 = vmatprep.mubr.f32.mxu0 0.0
        %608 = vmatmul.mubr.f32.gmra.mxu0 %v285
        %v609 = vpop.f32.mrf.mxu0
        %v610 = vadd.f32 %v358, %v609
        %v611 = vpop.f32.mrf.mxu0
        %v612 = vadd.f32 %v362, %v611
        %613 = vmatprep.mubr.f32.mxu0 0.0
        %614 = vmatmul.mubr.f32.gmra.mxu0 %v286
        %v615 = vpop.f32.mrf.mxu0
        %v616 = vadd.f32 %v358, %v615
        %v617 = vpop.f32.mrf.mxu0
        %v618 = vadd.f32 %v362, %v617
        %619 = vmatprep.mubr.f32.mxu0 0.0
        %620 = vmatmul.mubr.f32.gmra.mxu0 %v287
        %v621 = vpop.f32.mrf.mxu0
        %v622 = vadd.f32 %v358, %v621
        %v623 = vpop.f32.mrf.mxu0
        %v624 = vadd.f32 %v362, %v623
        %625 = vmatprep.mubr.f32.mxu0 0.0
        %626 = vmatmul.mubr.f32.gmra.mxu0 %v288
        %v627 = vpop.f32.mrf.mxu0
        %v628 = vadd.f32 %v358, %v627
        %v629 = vpop.f32.mrf.mxu0
        %v630 = vadd.f32 %v362, %v629
        %631 = vdwg.mxu0
        %632 = vmatprep.subr.mxu0 %v352
        %633 = vmatpush1.msra.mxu0 %v351
        %634 = vmatprep.subr.mxu0 %v348
        %635 = vmatpush1.msra.mxu0 %v347
        %636 = vmatprep.subr.mxu0 %v344
        %637 = vmatpush1.msra.mxu0 %v343
        %638 = vmatprep.subr.mxu0 %v340
        %639 = vmatpush1.msra.mxu0 %v339
        %640 = vmatprep.subr.mxu0 %v336
        %641 = vmatpush1.msra.mxu0 %v335
        %642 = vmatprep.subr.mxu0 %v332
        %643 = vmatpush1.msra.mxu0 %v331
        %644 = vmatprep.subr.mxu0 %v328
        %645 = vmatpush1.msra.mxu0 %v327
        %646 = vmatprep.subr.mxu0 %v324
        %647 = vmatpush1.msra.mxu0 %v323
        %648 = vmatprep.subr.mxu0 %v320
        %649 = vmatpush1.msra.mxu0 %v319
        %650 = vmatprep.subr.mxu0 %v316
        %651 = vmatpush1.msra.mxu0 %v315
        %652 = vmatprep.subr.mxu0 %v312
        %653 = vmatpush1.msra.mxu0 %v311
        %654 = vmatprep.subr.mxu0 %v308
        %655 = vmatpush1.msra.mxu0 %v307
        %656 = vmatprep.subr.mxu0 %v304
        %657 = vmatpush1.msra.mxu0 %v303
        %658 = vmatprep.subr.mxu0 %v300
        %659 = vmatpush1.msra.mxu0 %v299
        %660 = vmatprep.subr.mxu0 %v296
        %661 = vmatpush1.msra.mxu0 %v295
        %662 = vmatprep.subr.mxu0 %v292
        %663 = vmatpush1.msra.mxu0 %v291
        %664 = vmatprep.subr.mxu0 0.0
        %665 = vmatpush2.msra.mxu0 0.0
        %666 = vmatprep.subr.mxu0 0.0
        %667 = vmatpush2.msra.mxu0 0.0
        %668 = vmatprep.subr.mxu0 0.0
        %669 = vmatpush2.msra.mxu0 0.0
        %670 = vmatprep.subr.mxu0 0.0
        %671 = vmatpush2.msra.mxu0 0.0
        %672 = vmatprep.subr.mxu0 0.0
        %673 = vmatpush2.msra.mxu0 0.0
        %674 = vmatprep.subr.mxu0 0.0
        %675 = vmatpush2.msra.mxu0 0.0
        %676 = vmatprep.subr.mxu0 0.0
        %677 = vmatpush2.msra.mxu0 0.0
        %678 = vmatprep.subr.mxu0 0.0
        %679 = vmatpush2.msra.mxu0 0.0
        %680 = vmatprep.subr.mxu0 0.0
        %681 = vmatpush2.msra.mxu0 0.0
        %682 = vmatprep.subr.mxu0 0.0
        %683 = vmatpush2.msra.mxu0 0.0
        %684 = vmatprep.subr.mxu0 0.0
        %685 = vmatpush2.msra.mxu0 0.0
        %686 = vmatprep.subr.mxu0 0.0
        %687 = vmatpush2.msra.mxu0 0.0
        %688 = vmatprep.subr.mxu0 0.0
        %689 = vmatpush2.msra.mxu0 0.0
        %690 = vmatprep.subr.mxu0 0.0
        %691 = vmatpush2.msra.mxu0 0.0
        %692 = vmatprep.subr.mxu0 0.0
        %693 = vmatpush2.msra.mxu0 0.0
        %694 = vmatprep.subr.mxu0 0.0
        %695 = vmatpush2.msra.mxu0 0.0
        %696 = vmatprep.mubr.f32.mxu0 0.0
        %697 = vmatmul.mubr.f32.gmra.mxu0 %v257
        %v698 = vpop.f32.mrf.mxu0
        %v699 = vadd.f32 %v366, %v698
        %v700 = vpop.f32.mrf.mxu0
        %v701 = vadd.f32 %v370, %v700
        %702 = vmatprep.mubr.f32.mxu0 0.0
        %703 = vmatmul.mubr.f32.gmra.mxu0 %v258
        %v704 = vpop.f32.mrf.mxu0
        %v705 = vadd.f32 %v366, %v704
        %v706 = vpop.f32.mrf.mxu0
        %v707 = vadd.f32 %v370, %v706
        %708 = vmatprep.mubr.f32.mxu0 0.0
        %709 = vmatmul.mubr.f32.gmra.mxu0 %v259
        %v710 = vpop.f32.mrf.mxu0
        %v711 = vadd.f32 %v366, %v710
        %v712 = vpop.f32.mrf.mxu0
        %v713 = vadd.f32 %v370, %v712
        %714 = vmatprep.mubr.f32.mxu0 0.0
        %715 = vmatmul.mubr.f32.gmra.mxu0 %v260
        %v716 = vpop.f32.mrf.mxu0
        %v717 = vadd.f32 %v366, %v716
        %v718 = vpop.f32.mrf.mxu0
        %v719 = vadd.f32 %v370, %v718
        %720 = vmatprep.mubr.f32.mxu0 0.0
        %721 = vmatmul.mubr.f32.gmra.mxu0 %v261
        %v722 = vpop.f32.mrf.mxu0
        %v723 = vadd.f32 %v366, %v722
        %v724 = vpop.f32.mrf.mxu0
        %v725 = vadd.f32 %v370, %v724
        %726 = vmatprep.mubr.f32.mxu0 0.0
        %727 = vmatmul.mubr.f32.gmra.mxu0 %v262
        %v728 = vpop.f32.mrf.mxu0
        %v729 = vadd.f32 %v366, %v728
        %v730 = vpop.f32.mrf.mxu0
        %v731 = vadd.f32 %v370, %v730
        %732 = vmatprep.mubr.f32.mxu0 0.0
        %733 = vmatmul.mubr.f32.gmra.mxu0 %v263
        %v734 = vpop.f32.mrf.mxu0
        %v735 = vadd.f32 %v366, %v734
        %v736 = vpop.f32.mrf.mxu0
        %v737 = vadd.f32 %v370, %v736
        %738 = vmatprep.mubr.f32.mxu0 0.0
        %739 = vmatmul.mubr.f32.gmra.mxu0 %v264
        %v740 = vpop.f32.mrf.mxu0
        %v741 = vadd.f32 %v366, %v740
        %v742 = vpop.f32.mrf.mxu0
        %v743 = vadd.f32 %v370, %v742
        %744 = vmatprep.mubr.f32.mxu0 0.0
        %745 = vmatmul.mubr.f32.gmra.mxu0 %v265
        %v746 = vpop.f32.mrf.mxu0
        %v747 = vadd.f32 %v366, %v746
        %v748 = vpop.f32.mrf.mxu0
        %v749 = vadd.f32 %v370, %v748
        %750 = vmatprep.mubr.f32.mxu0 0.0
        %751 = vmatmul.mubr.f32.gmra.mxu0 %v266
        %v752 = vpop.f32.mrf.mxu0
        %v753 = vadd.f32 %v366, %v752
        %v754 = vpop.f32.mrf.mxu0
        %v755 = vadd.f32 %v370, %v754
        %756 = vmatprep.mubr.f32.mxu0 0.0
        %757 = vmatmul.mubr.f32.gmra.mxu0 %v267
        %v758 = vpop.f32.mrf.mxu0
        %v759 = vadd.f32 %v366, %v758
        %v760 = vpop.f32.mrf.mxu0
        %v761 = vadd.f32 %v370, %v760
        %762 = vmatprep.mubr.f32.mxu0 0.0
        %763 = vmatmul.mubr.f32.gmra.mxu0 %v268
        %v764 = vpop.f32.mrf.mxu0
        %v765 = vadd.f32 %v366, %v764
        %v766 = vpop.f32.mrf.mxu0
        %v767 = vadd.f32 %v370, %v766
        %768 = vmatprep.mubr.f32.mxu0 0.0
        %769 = vmatmul.mubr.f32.gmra.mxu0 %v269
        %v770 = vpop.f32.mrf.mxu0
        %v771 = vadd.f32 %v366, %v770
        %v772 = vpop.f32.mrf.mxu0
        %v773 = vadd.f32 %v370, %v772
        %774 = vmatprep.mubr.f32.mxu0 0.0
        %775 = vmatmul.mubr.f32.gmra.mxu0 %v270
        %v776 = vpop.f32.mrf.mxu0
        %v777 = vadd.f32 %v366, %v776
        %v778 = vpop.f32.mrf.mxu0
        %v779 = vadd.f32 %v370, %v778
        %780 = vmatprep.mubr.f32.mxu0 0.0
        %781 = vmatmul.mubr.f32.gmra.mxu0 %v271
        %v782 = vpop.f32.mrf.mxu0
        %v783 = vadd.f32 %v366, %v782
        %v784 = vpop.f32.mrf.mxu0
        %v785 = vadd.f32 %v370, %v784
        %786 = vmatprep.mubr.f32.mxu0 0.0
        %787 = vmatmul.mubr.f32.gmra.mxu0 %v272
        %v788 = vpop.f32.mrf.mxu0
        %v789 = vadd.f32 %v366, %v788
        %v790 = vpop.f32.mrf.mxu0
        %v791 = vadd.f32 %v370, %v790
        %792 = vmatprep.mubr.f32.mxu0 0.0
        %793 = vmatmul.mubr.f32.gmra.mxu0 %v273
        %v794 = vpop.f32.mrf.mxu0
        %v795 = vadd.f32 %v366, %v794
        %v796 = vpop.f32.mrf.mxu0
        %v797 = vadd.f32 %v370, %v796
        %798 = vmatprep.mubr.f32.mxu0 0.0
        %799 = vmatmul.mubr.f32.gmra.mxu0 %v274
        %v800 = vpop.f32.mrf.mxu0
        %v801 = vadd.f32 %v366, %v800
        %v802 = vpop.f32.mrf.mxu0
        %v803 = vadd.f32 %v370, %v802
        %804 = vmatprep.mubr.f32.mxu0 0.0
        %805 = vmatmul.mubr.f32.gmra.mxu0 %v275
        %v806 = vpop.f32.mrf.mxu0
        %v807 = vadd.f32 %v366, %v806
        %v808 = vpop.f32.mrf.mxu0
        %v809 = vadd.f32 %v370, %v808
        %810 = vmatprep.mubr.f32.mxu0 0.0
        %811 = vmatmul.mubr.f32.gmra.mxu0 %v276
        %v812 = vpop.f32.mrf.mxu0
        %v813 = vadd.f32 %v366, %v812
        %v814 = vpop.f32.mrf.mxu0
        %v815 = vadd.f32 %v370, %v814
        %816 = vmatprep.mubr.f32.mxu0 0.0
        %817 = vmatmul.mubr.f32.gmra.mxu0 %v277
        %v818 = vpop.f32.mrf.mxu0
        %v819 = vadd.f32 %v366, %v818
        %v820 = vpop.f32.mrf.mxu0
        %v821 = vadd.f32 %v370, %v820
        %822 = vmatprep.mubr.f32.mxu0 0.0
        %823 = vmatmul.mubr.f32.gmra.mxu0 %v278
        %v824 = vpop.f32.mrf.mxu0
        %v825 = vadd.f32 %v366, %v824
        %v826 = vpop.f32.mrf.mxu0
        %v827 = vadd.f32 %v370, %v826
        %828 = vmatprep.mubr.f32.mxu0 0.0
        %829 = vmatmul.mubr.f32.gmra.mxu0 %v279
        %v830 = vpop.f32.mrf.mxu0
        %v831 = vadd.f32 %v366, %v830
        %v832 = vpop.f32.mrf.mxu0
        %v833 = vadd.f32 %v370, %v832
        %834 = vmatprep.mubr.f32.mxu0 0.0
        %835 = vmatmul.mubr.f32.gmra.mxu0 %v280
        %v836 = vpop.f32.mrf.mxu0
        %v837 = vadd.f32 %v366, %v836
        %v838 = vpop.f32.mrf.mxu0
        %v839 = vadd.f32 %v370, %v838
        %840 = vmatprep.mubr.f32.mxu0 0.0
        %841 = vmatmul.mubr.f32.gmra.mxu0 %v281
        %v842 = vpop.f32.mrf.mxu0
        %v843 = vadd.f32 %v366, %v842
        %v844 = vpop.f32.mrf.mxu0
        %v845 = vadd.f32 %v370, %v844
        %846 = vmatprep.mubr.f32.mxu0 0.0
        %847 = vmatmul.mubr.f32.gmra.mxu0 %v282
        %v848 = vpop.f32.mrf.mxu0
        %v849 = vadd.f32 %v366, %v848
        %v850 = vpop.f32.mrf.mxu0
        %v851 = vadd.f32 %v370, %v850
        %852 = vmatprep.mubr.f32.mxu0 0.0
        %853 = vmatmul.mubr.f32.gmra.mxu0 %v283
        %v854 = vpop.f32.mrf.mxu0
        %v855 = vadd.f32 %v366, %v854
        %v856 = vpop.f32.mrf.mxu0
        %v857 = vadd.f32 %v370, %v856
        %858 = vmatprep.mubr.f32.mxu0 0.0
        %859 = vmatmul.mubr.f32.gmra.mxu0 %v284
        %v860 = vpop.f32.mrf.mxu0
        %v861 = vadd.f32 %v366, %v860
        %v862 = vpop.f32.mrf.mxu0
        %v863 = vadd.f32 %v370, %v862
        %864 = vmatprep.mubr.f32.mxu0 0.0
        %865 = vmatmul.mubr.f32.gmra.mxu0 %v285
        %v866 = vpop.f32.mrf.mxu0
        %v867 = vadd.f32 %v366, %v866
        %v868 = vpop.f32.mrf.mxu0
        %v869 = vadd.f32 %v370, %v868
        %870 = vmatprep.mubr.f32.mxu0 0.0
        %871 = vmatmul.mubr.f32.gmra.mxu0 %v286
        %v872 = vpop.f32.mrf.mxu0
        %v873 = vadd.f32 %v366, %v872
        %v874 = vpop.f32.mrf.mxu0
        %v875 = vadd.f32 %v370, %v874
        %876 = vmatprep.mubr.f32.mxu0 0.0
        %877 = vmatmul.mubr.f32.gmra.mxu0 %v287
        %v878 = vpop.f32.mrf.mxu0
        %v879 = vadd.f32 %v366, %v878
        %v880 = vpop.f32.mrf.mxu0
        %v881 = vadd.f32 %v370, %v880
        %882 = vmatprep.mubr.f32.mxu0 0.0
        %883 = vmatmul.mubr.f32.gmra.mxu0 %v288
        %v884 = vpop.f32.mrf.mxu0
        %v885 = vadd.f32 %v366, %v884
        %v886 = vpop.f32.mrf.mxu0
        %v887 = vadd.f32 %v370, %v886
        %888 = vdwg.mxu0
        %889 = vst [vmem:[%s246] sm:$0xff] %v442
        %890 = vst [vmem:[%s246 + $0x8] sm:$0xff] %v448
        %891 = vst [vmem:[%s246 + $0x10] sm:$0xff] %v454
        %892 = vst [vmem:[%s246 + $0x18] sm:$0xff] %v460
        %893 = vst [vmem:[%s246 + $0x20] sm:$0xff] %v466
        %894 = vst [vmem:[%s246 + $0x28] sm:$0xff] %v472
        %895 = vst [vmem:[%s246 + $0x30] sm:$0xff] %v478
        %896 = vst [vmem:[%s246 + $0x38] sm:$0xff] %v484
        %897 = vst [vmem:[%s246 + $0x40] sm:$0xff] %v490
        %898 = vst [vmem:[%s246 + $0x48] sm:$0xff] %v496
        %899 = vst [vmem:[%s246 + $0x50] sm:$0xff] %v502
        %900 = vst [vmem:[%s246 + $0x58] sm:$0xff] %v508
        %901 = vst [vmem:[%s246 + $0x60] sm:$0xff] %v514
        %902 = vst [vmem:[%s246 + $0x68] sm:$0xff] %v520
        %903 = vst [vmem:[%s246 + $0x70] sm:$0xff] %v526
        %904 = vst [vmem:[%s246 + $0x78] sm:$0xff] %v532
        %905 = vst [vmem:[%s246 + $0x80] sm:$0xff] %v538
        %906 = vst [vmem:[%s246 + $0x88] sm:$0xff] %v544
        %907 = vst [vmem:[%s246 + $0x90] sm:$0xff] %v550
        %908 = vst [vmem:[%s246 + $0x98] sm:$0xff] %v556
        %909 = vst [vmem:[%s246 + $0xa0] sm:$0xff] %v562
        %910 = vst [vmem:[%s246 + $0xa8] sm:$0xff] %v568
        %911 = vst [vmem:[%s246 + $0xb0] sm:$0xff] %v574
        %912 = vst [vmem:[%s246 + $0xb8] sm:$0xff] %v580
        %913 = vst [vmem:[%s246 + $0xc0] sm:$0xff] %v586
        %914 = vst [vmem:[%s246 + $0xc8] sm:$0xff] %v592
        %915 = vst [vmem:[%s246 + $0xd0] sm:$0xff] %v598
        %916 = vst [vmem:[%s246 + $0xd8] sm:$0xff] %v604
        %917 = vst [vmem:[%s246 + $0xe0] sm:$0xff] %v610
        %918 = vst [vmem:[%s246 + $0xe8] sm:$0xff] %v616
        %919 = vst [vmem:[%s246 + $0xf0] sm:$0xff] %v622
        %920 = vst [vmem:[%s246 + $0xf8] sm:$0xff] %v628
        %921 = vst [vmem:[%s253] sm:$0xff] %v444
        %922 = vst [vmem:[%s253 + $0x8] sm:$0xff] %v699
        %923 = vst [vmem:[%s253 + $0x10] sm:$0xff] %v701
        %924 = vst [vmem:[%s253 + $0x18] sm:$0xff] %v450
        %925 = vst [vmem:[%s253 + $0x20] sm:$0xff] %v705
        %926 = vst [vmem:[%s253 + $0x28] sm:$0xff] %v707
        %927 = vst [vmem:[%s253 + $0x30] sm:$0xff] %v456
        %928 = vst [vmem:[%s253 + $0x38] sm:$0xff] %v711
        %929 = vst [vmem:[%s253 + $0x40] sm:$0xff] %v713
        %930 = vst [vmem:[%s253 + $0x48] sm:$0xff] %v462
        %931 = vst [vmem:[%s253 + $0x50] sm:$0xff] %v717
        %932 = vst [vmem:[%s253 + $0x58] sm:$0xff] %v719
        %933 = vst [vmem:[%s253 + $0x60] sm:$0xff] %v468
        %934 = vst [vmem:[%s253 + $0x68] sm:$0xff] %v723
        %935 = vst [vmem:[%s253 + $0x70] sm:$0xff] %v725
        %936 = vst [vmem:[%s253 + $0x78] sm:$0xff] %v474
        %937 = vst [vmem:[%s253 + $0x80] sm:$0xff] %v729
        %938 = vst [vmem:[%s253 + $0x88] sm:$0xff] %v731
        %939 = vst [vmem:[%s253 + $0x90] sm:$0xff] %v480
        %940 = vst [vmem:[%s253 + $0x98] sm:$0xff] %v735
        %941 = vst [vmem:[%s253 + $0xa0] sm:$0xff] %v737
        %942 = vst [vmem:[%s253 + $0xa8] sm:$0xff] %v486
        %943 = vst [vmem:[%s253 + $0xb0] sm:$0xff] %v741
        %944 = vst [vmem:[%s253 + $0xb8] sm:$0xff] %v743
        %945 = vst [vmem:[%s253 + $0xc0] sm:$0xff] %v492
        %946 = vst [vmem:[%s253 + $0xc8] sm:$0xff] %v747
        %947 = vst [vmem:[%s253 + $0xd0] sm:$0xff] %v749
        %948 = vst [vmem:[%s253 + $0xd8] sm:$0xff] %v498
        %949 = vst [vmem:[%s253 + $0xe0] sm:$0xff] %v753
        %950 = vst [vmem:[%s253 + $0xe8] sm:$0xff] %v755
        %951 = vst [vmem:[%s253 + $0xf0] sm:$0xff] %v504
        %952 = vst [vmem:[%s253 + $0xf8] sm:$0xff] %v759
        %953 = vst [vmem:[%s253 + $0x100] sm:$0xff] %v761
        %954 = vst [vmem:[%s253 + $0x108] sm:$0xff] %v510
        %955 = vst [vmem:[%s253 + $0x110] sm:$0xff] %v765
        %956 = vst [vmem:[%s253 + $0x118] sm:$0xff] %v767
        %957 = vst [vmem:[%s253 + $0x120] sm:$0xff] %v516
        %958 = vst [vmem:[%s253 + $0x128] sm:$0xff] %v771
        %959 = vst [vmem:[%s253 + $0x130] sm:$0xff] %v773
        %960 = vst [vmem:[%s253 + $0x138] sm:$0xff] %v522
        %961 = vst [vmem:[%s253 + $0x140] sm:$0xff] %v777
        %962 = vst [vmem:[%s253 + $0x148] sm:$0xff] %v779
        %963 = vst [vmem:[%s253 + $0x150] sm:$0xff] %v528
        %964 = vst [vmem:[%s253 + $0x158] sm:$0xff] %v783
        %965 = vst [vmem:[%s253 + $0x160] sm:$0xff] %v785
        %966 = vst [vmem:[%s253 + $0x168] sm:$0xff] %v534
        %967 = vst [vmem:[%s253 + $0x170] sm:$0xff] %v789
        %968 = vst [vmem:[%s253 + $0x178] sm:$0xff] %v791
        %969 = vst [vmem:[%s253 + $0x180] sm:$0xff] %v540
        %970 = vst [vmem:[%s253 + $0x188] sm:$0xff] %v795
        %971 = vst [vmem:[%s253 + $0x190] sm:$0xff] %v797
        %972 = vst [vmem:[%s253 + $0x198] sm:$0xff] %v546
        %973 = vst [vmem:[%s253 + $0x1a0] sm:$0xff] %v801
        %974 = vst [vmem:[%s253 + $0x1a8] sm:$0xff] %v803
        %975 = vst [vmem:[%s253 + $0x1b0] sm:$0xff] %v552
        %976 = vst [vmem:[%s253 + $0x1b8] sm:$0xff] %v807
        %977 = vst [vmem:[%s253 + $0x1c0] sm:$0xff] %v809
        %978 = vst [vmem:[%s253 + $0x1c8] sm:$0xff] %v558
        %979 = vst [vmem:[%s253 + $0x1d0] sm:$0xff] %v813
        %980 = vst [vmem:[%s253 + $0x1d8] sm:$0xff] %v815
        %981 = vst [vmem:[%s253 + $0x1e0] sm:$0xff] %v564
        %982 = vst [vmem:[%s253 + $0x1e8] sm:$0xff] %v819
        %983 = vst [vmem:[%s253 + $0x1f0] sm:$0xff] %v821
        %984 = vst [vmem:[%s253 + $0x1f8] sm:$0xff] %v570
        %985 = vst [vmem:[%s253 + $0x200] sm:$0xff] %v825
        %986 = vst [vmem:[%s253 + $0x208] sm:$0xff] %v827
        %987 = vst [vmem:[%s253 + $0x210] sm:$0xff] %v576
        %988 = vst [vmem:[%s253 + $0x218] sm:$0xff] %v831
        %989 = vst [vmem:[%s253 + $0x220] sm:$0xff] %v833
        %990 = vst [vmem:[%s253 + $0x228] sm:$0xff] %v582
        %991 = vst [vmem:[%s253 + $0x230] sm:$0xff] %v837
        %992 = vst [vmem:[%s253 + $0x238] sm:$0xff] %v839
        %993 = vst [vmem:[%s253 + $0x240] sm:$0xff] %v588
        %994 = vst [vmem:[%s253 + $0x248] sm:$0xff] %v843
        %995 = vst [vmem:[%s253 + $0x250] sm:$0xff] %v845
        %996 = vst [vmem:[%s253 + $0x258] sm:$0xff] %v594
        %997 = vst [vmem:[%s253 + $0x260] sm:$0xff] %v849
        %998 = vst [vmem:[%s253 + $0x268] sm:$0xff] %v851
        %999 = vst [vmem:[%s253 + $0x270] sm:$0xff] %v600
        %1000 = vst [vmem:[%s253 + $0x278] sm:$0xff] %v855
        %1001 = vst [vmem:[%s253 + $0x280] sm:$0xff] %v857
        %1002 = vst [vmem:[%s253 + $0x288] sm:$0xff] %v606
        %1003 = vst [vmem:[%s253 + $0x290] sm:$0xff] %v861
        %1004 = vst [vmem:[%s253 + $0x298] sm:$0xff] %v863
        %1005 = vst [vmem:[%s253 + $0x2a0] sm:$0xff] %v612
        %1006 = vst [vmem:[%s253 + $0x2a8] sm:$0xff] %v867
        %1007 = vst [vmem:[%s253 + $0x2b0] sm:$0xff] %v869
        %1008 = vst [vmem:[%s253 + $0x2b8] sm:$0xff] %v618
        %1009 = vst [vmem:[%s253 + $0x2c0] sm:$0xff] %v873
        %1010 = vst [vmem:[%s253 + $0x2c8] sm:$0xff] %v875
        %1011 = vst [vmem:[%s253 + $0x2d0] sm:$0xff] %v624
        %1012 = vst [vmem:[%s253 + $0x2d8] sm:$0xff] %v879
        %1013 = vst [vmem:[%s253 + $0x2e0] sm:$0xff] %v881
        %1014 = vst [vmem:[%s253 + $0x2e8] sm:$0xff] %v630
        %1015 = vst [vmem:[%s253 + $0x2f0] sm:$0xff] %v885
        %1016 = vst [vmem:[%s253 + $0x2f8] sm:$0xff] %v887
        %s1017 = sand.u32 %s102, 1
        %s1018 = scalar_lea.sflag [#allocation4], %s1017
        %s1019 = sand.u32 %s102, 1
        %s1020 = smul.addr %s1019, 256
        %s1021 = scalar_lea.vmem [#allocation8], %s1020
        %s1022 = sand.u32 %s128, 1
        %s1023 = scalar_lea.sflag [#allocation10], %s1022
        %s1024 = sand.u32 %s128, 1
        %s1025 = smul.addr %s1024, 768
        %s1026 = scalar_lea.vmem [#allocation9], %s1025
        // Predicated region
        $region45: #{tpu_custom_call.1} parent=31 // pred_check
          %p1027 = pneg %p112
        $region46: #{tpu_custom_call.1} parent=31 // pred_check_branch
          %1029 = sbr.rel (%p1027) target = $region48
        $region47: #{tpu_custom_call.1} parent=31 // pred_region
          %s1030 = smul.u32 32, %s26
          %s1032 = ssub.s32 4096, 4096
          %1033 = vsyncadd %s1018, %s1032
          %s1034 = smul.addr %s1030, 128
          %s1035 = scalar_lea.hbm %s3, %s1034
          %s1036 = sshll.u32 %s1021, 4
          %s1037 = int_to_ptr.vmem [resolvable:$true] %s1036
          %1042 = dma.vmem_to_hbm [thread:$0]  %s1037, 4096, %s1035, %s1018, 128, 128, 8
        $region48: #{tpu_custom_call.1} parent=31 // pred_fallthru
          _
        // Predicated region
        $region49: #{tpu_custom_call.1} parent=31 // pred_check
          %p1043 = pneg %p138
        $region50: #{tpu_custom_call.1} parent=31 // pred_check_branch
          %1045 = sbr.rel (%p1043) target = $region52
        $region51: #{tpu_custom_call.1} parent=31 // pred_region
          %s1046 = smul.u32 32, %s26
          %s1048 = ssub.s32 12288, 12288
          %1049 = vsyncadd %s1023, %s1048
          %s1050 = smul.addr %s1046, 3
          %s1051 = smul.addr %s1050, 128
          %s1052 = scalar_lea.hbm %s4, %s1051
          %s1053 = sshll.u32 %s1026, 4
          %s1054 = int_to_ptr.vmem [resolvable:$true] %s1053
          %1059 = dma.vmem_to_hbm [thread:$0]  %s1054, 12288, %s1052, %s1023, 384, 384, 24
        $region52: #{tpu_custom_call.1} parent=31 // pred_fallthru
          _
      $region32: #{tpu_custom_call.1} parent=5 // pred_fallthru
        _
      %p1060 = scmp.le.s32.totalorder 2, %s21
      // Predicated region
      $region53: #{tpu_custom_call.1} parent=5 // pred_check
        %p1061 = pneg %p1060
      $region54: #{tpu_custom_call.1} parent=5 // pred_check_branch
        %1063 = sbr.rel (%p1061) target = $region56
      $region55: #{tpu_custom_call.1} parent=5 // pred_region
        %s1064 = ssub.s32 %s21, 2
        // Predicated region
        $region57: #{tpu_custom_call.1} parent=55 // pred_check
          %p1065 = pneg %p118
        $region58: #{tpu_custom_call.1} parent=55 // pred_check_branch
          %1067 = sbr.rel (%p1065) target = $region60
        $region59: #{tpu_custom_call.1} parent=55 // pred_region
          %s1068 = sand.u32 %s103, 1
          %s1069 = scalar_lea.sflag [#allocation4], %s1068
          %s1070 = sand.u32 %s103, 1
          %s1071 = smul.addr %s1070, 256
          %s1072 = scalar_lea.vmem [#allocation8], %s1071
          %1073 = dma.done %s1069, 4096
        $region60: #{tpu_custom_call.1} parent=55 // pred_fallthru
          _
        // Predicated region
        $region61: #{tpu_custom_call.1} parent=55 // pred_check
          %p1074 = pneg %p144
        $region62: #{tpu_custom_call.1} parent=55 // pred_check_branch
          %1076 = sbr.rel (%p1074) target = $region64
        $region63: #{tpu_custom_call.1} parent=55 // pred_region
          %s1077 = sand.u32 %s129, 1
          %s1078 = scalar_lea.sflag [#allocation10], %s1077
          %s1079 = sand.u32 %s129, 1
          %s1080 = smul.addr %s1079, 768
          %s1081 = scalar_lea.vmem [#allocation9], %s1080
          %1082 = dma.done %s1078, 12288
        $region64: #{tpu_custom_call.1} parent=55 // pred_fallthru
          _
      $region56: #{tpu_custom_call.1} parent=5 // pred_fallthru
        _
    $region6: #{tpu_custom_call.1} parent=1 // loop_footer
      %s25 = sadd.s32 1, %s21
    $region7: #{tpu_custom_call.1} parent=1 // loop_footer_branch
      %20 = sbr.rel target = $region3
    $region8: #{tpu_custom_call.1} parent=1 // loop_exit
      _
    %1083 = vsyncpa [#allocation3], 1
    %s1084 = scalar_lea.sflag [#allocation3], 1
    %1085 = vsyncpa %s1084, 1
    %1086 = vsyncpa [#allocation6], 1
    %1087 = vsyncpa [#allocation4], 1
    %s1088 = scalar_lea.sflag [#allocation4], 1
    %1089 = vsyncpa %s1088, 1
    %1090 = vsyncpa [#allocation10], 1
    %s1091 = scalar_lea.sflag [#allocation10], 1
    %1092 = vsyncpa %s1091, 1

</llo_original>
